<compile_context>
chip_gen: v5e
topology: v5e:2x2
jax: 0.10.0
libtpu: 0.0.40
codegen_flags: <defaults>
</compile_context>

<pallas_src>
import functools
import math

import jax
import jax.numpy as jnp
from jax.experimental import pallas as pl
from jax.experimental.pallas import tpu as pltpu


def _cdiv(a, b):
    return -(-a // b)


# ---------------------------------------------------------------------------
# Kernel
# ---------------------------------------------------------------------------
def _fused_mlp_kernel(num_layers, x_ref, *refs):
    """refs = (w0, b0, w1, b1, ..., o_ref).

    x_ref: (Cin, tm)        one batch item's pixel tile (channels on sublanes,
                            pixels on lanes -> lane-dense loads/stores)
    w_l:   (Cout_l, Cin_l)  BN-folded conv weight (f32)
    b_l:   (Cout_l, 1)      BN-folded bias (f32, broadcast over lanes)
    o_ref: (Cout_last, tm)
    """
    o_ref = refs[-1]
    h = x_ref[...].astype(jnp.float32)
    for l in range(num_layers):  # static unroll: layer count fixed at trace time
        w = refs[2 * l][...]
        b = refs[2 * l + 1][...]
        h = jnp.dot(w, h, preferred_element_type=jnp.float32)
        h = jnp.maximum(h + b, 0.0)  # folded BN affine already in (w, b); ReLU
    o_ref[...] = h.astype(o_ref.dtype)


# ---------------------------------------------------------------------------
# Chip capability query & tile selection
# ---------------------------------------------------------------------------
def _chip_caps():
    """Best-effort chip query; conservative fallbacks (v7x-sized VMEM, 1 TC, f32 I/O)."""
    vmem_phys = 64 * 1024 * 1024  # v7x per-TC VMEM (smallest of v5e/v6e/v7x)
    try:
        info = pltpu.get_tpu_info()
        vmem_phys = int(getattr(info, "vmem_capacity_bytes", vmem_phys))
    except Exception:
        pass
    kind = ""
    try:
        kind = jax.devices()[0].device_kind.lower()
    except Exception:
        pass
    num_tc = 2 if "7" in kind else 1                 # v7x: 2 TensorCores / chip
    bf16_io = ("v6" in kind) or ("7" in kind)        # bf16 VPU on v6e/v7x; f32 on v5e
    return num_tc, vmem_phys, bf16_io


def _choose_tile(hw, n_batch, cin, couts, num_tc, vmem_budget, in_bytes, out_bytes,
                 target=4096):
    """Pixel (lane) tile: biggest VMEM-fitting tile, multiple of 128 (or full H*W).

    On single-TC chips (v5e/v6e) the grid is a serial loop, so just maximize the
    tile.  On multi-TC chips (v7x) keep >= num_tc total grid steps so both cores
    get work under dimension_semantics="parallel".
    """
    cout_last = couts[-1]
    # VMEM bytes per lane of tile: double-buffered in/out streams + f32 intermediates.
    per_lane = 2 * cin * in_bytes + 2 * cout_last * out_bytes + (cin + sum(couts)) * 4
    tm = min(target, hw, max(128, vmem_budget // max(per_lane, 1)))
    if tm < hw:
        tm = max(128, (tm // 128) * 128)  # lane-dense unless covering the full width
    else:
        tm = hw
    if num_tc > 1:
        while tm > 128 and n_batch * _cdiv(hw, tm) < num_tc:
            tm //= 2
        if tm < hw:
            tm = max(128, (tm // 128) * 128)
    return tm


# ---------------------------------------------------------------------------
# pallas_call wrapper
# ---------------------------------------------------------------------------
def fused_mlp(x_ncm, layer_params, tm, out_dtype, vmem_limit_bytes):
    """x_ncm: (N, Cin, HW). Returns (N, Cout_last, HW) in out_dtype."""
    n, cin, hw = x_ncm.shape
    num_layers = len(layer_params)
    cout_last = layer_params[-1][0].shape[0]
    grid = (n, _cdiv(hw, tm))

    in_specs = [pl.BlockSpec((pl.Squeezed(), cin, tm), lambda b, i: (b, 0, i))]
    operands = [x_ncm]
    flops = 0
    param_bytes = 0
    for (w, bvec) in layer_params:
        co, ci = w.shape
        # Grid-invariant operands: constant index_map -> fetched once, kept in VMEM.
        in_specs.append(pl.BlockSpec((co, ci), lambda b, i: (0, 0)))
        in_specs.append(pl.BlockSpec((co, 1), lambda b, i: (0, 0)))
        operands += [w, bvec]
        flops += 2 * co * ci * n * hw
        param_bytes += (co * ci + co) * 4

    bytes_accessed = (x_ncm.size * x_ncm.dtype.itemsize
                      + param_bytes
                      + n * cout_last * hw * jnp.dtype(out_dtype).itemsize)

    return pl.pallas_call(
        functools.partial(_fused_mlp_kernel, num_layers),
        out_shape=jax.ShapeDtypeStruct((n, cout_last, hw), out_dtype),
        grid_spec=pltpu.PrefetchScalarGridSpec(
            num_scalar_prefetch=0,
            grid=grid,
            in_specs=in_specs,
            out_specs=pl.BlockSpec((pl.Squeezed(), cout_last, tm),
                                   lambda b, i: (b, 0, i)),
        ),
        compiler_params=pltpu.CompilerParams(
            dimension_semantics=("parallel", "parallel"),
            vmem_limit_bytes=int(vmem_limit_bytes),
        ),
        cost_estimate=pl.CostEstimate(
            flops=int(flops), transcendentals=0, bytes_accessed=int(bytes_accessed)
        ),
    )(*operands)


# ---------------------------------------------------------------------------
# Parameters (PyTorch-default-like init, BN folded into conv)
# ---------------------------------------------------------------------------
def init_mlp_params(key, in_channels, out_channels, eps=1e-5):
    """PyTorch-default-like init; BN (eval mode, default stats) + conv bias are
    folded into (w_folded, b_folded) so the kernel only does dot + add + ReLU."""
    channels = [in_channels] + list(out_channels)
    params = []
    for i in range(1, len(channels)):
        cin, cout = channels[i - 1], channels[i]
        key, k_w, k_b = jax.random.split(key, 3)
        bound = 1.0 / math.sqrt(cin)  # fan_in = cin * 1 * 1
        w = jax.random.uniform(k_w, (cout, cin), jnp.float32, -bound, bound)
        b = jax.random.uniform(k_b, (cout,), jnp.float32, -bound, bound)
        gamma = jnp.ones((cout,), jnp.float32)
        beta = jnp.zeros((cout,), jnp.float32)
        running_mean = jnp.zeros((cout,), jnp.float32)
        running_var = jnp.ones((cout,), jnp.float32)
        scale = gamma / jnp.sqrt(running_var + eps)
        w_folded = w * scale[:, None]                      # (Cout, Cin)
        b_folded = (b - running_mean) * scale + beta       # (Cout,)
        params.append((w_folded, b_folded.reshape(cout, 1)))
    return params


# ---------------------------------------------------------------------------
# Forward (no transposes / pads around the kernel)
# ---------------------------------------------------------------------------
def mlp_forward(x_nchw, params, out_dtype=None, target_tm=4096):
    """Fused MLP forward.  out_dtype=None -> bf16 output on v6e/v7x (halves the
    dominant HBM write stream; matmul still accumulates in f32), f32 otherwise.
    Pass out_dtype=jnp.float32 to reproduce the PyTorch module's dtype exactly."""
    n, c, h, w = x_nchw.shape
    hw = h * w
    num_tc, vmem_phys, bf16_ok = _chip_caps()
    if out_dtype is None:
        out_dtype = jnp.bfloat16 if bf16_ok else jnp.float32

    couts = [wl.shape[0] for wl, _ in params]
    in_bytes = x_nchw.dtype.itemsize
    out_bytes = jnp.dtype(out_dtype).itemsize

    # Scoped-VMEM request: ~3/4 of physical, <= 64 MiB (=> ~48 MiB on v7x).
    vmem_limit = min((vmem_phys * 3) // 4, 64 * 1024 * 1024)
    tm = _choose_tile(hw, n, c, couts, num_tc, vmem_limit // 2,
                      in_bytes, out_bytes, target=target_tm)

    # NCHW -> (N, C, H*W): contiguous reshape, no HBM data movement.
    x_ncm = x_nchw.reshape(n, c, hw)
    y = fused_mlp(x_ncm, params, tm, out_dtype, vmem_limit)   # (N, Cout_last, HW)
    return y.reshape(n, couts[-1], h, w)


def mlp_reference(x_nchw, params):
    """Pure-JAX reference of the same (eval-mode BN) math, for correctness check."""
    n, c, h, w = x_nchw.shape
    a = x_nchw.astype(jnp.float32).reshape(n, c, h * w)
    for wl, bl in params:
        a = jnp.maximum(jnp.einsum("oc,ncm->nom", wl, a) + bl[None, :, :], 0.0)
    return a.reshape(n, -1, h, w)


# ---------------------------------------------------------------------------
# Self-test
# ---------------------------------------------------------------------------
if __name__ == "__main__":
    key = jax.random.PRNGKey(0)
    k_x, k_p = jax.random.split(key)

    in_channels = 4
    out_channels = [32, 16]  # MLP(in_channels=4, out_channels=[32, 16])
    x = jax.random.normal(k_x, (2, in_channels, 16, 16), jnp.float32)  # NCHW

    params = init_mlp_params(k_p, in_channels, out_channels)
    ref = mlp_reference(x, params)

    # 1) Exact-dtype path (matches the PyTorch module: f32 everywhere) -> tight tol.
    out_f32 = jax.block_until_ready(
        jax.jit(functools.partial(mlp_forward, out_dtype=jnp.float32))(x, params))
    assert out_f32.shape == (2, out_channels[-1], 16, 16), out_f32.shape
    assert bool(jnp.all(out_f32 >= 0.0))  # ReLU output
    assert bool(jnp.allclose(out_f32, ref, rtol=1e-5, atol=1e-5)), "f32 mismatch vs ref"

    # 2) Auto-I/O path (bf16 output stream on v6e/v7x) -> dtype-appropriate tol.
    out_auto = jax.block_until_ready(jax.jit(mlp_forward)(x, params))
    assert out_auto.shape == (2, out_channels[-1], 16, 16), out_auto.shape
    tol = 2e-2 if out_auto.dtype == jnp.bfloat16 else 1e-5
    assert bool(jnp.allclose(out_auto.astype(jnp.float32), ref, rtol=tol, atol=tol)), \
        "auto-dtype mismatch vs ref"

    print("KERNEL_OK")
</pallas_src>

<mosaic_0001>
module attributes {stable_mosaic.version = 11 : i64} {
  func.func @_fused_mlp_kernel(%arg0: i32, %arg1: i32, %arg2: memref<1x4x256xf32, #tpu.memory_space<vmem>>, %arg3: memref<32x4xf32, #tpu.memory_space<vmem>>, %arg4: memref<32x1xf32, #tpu.memory_space<vmem>>, %arg5: memref<16x32xf32, #tpu.memory_space<vmem>>, %arg6: memref<16x1xf32, #tpu.memory_space<vmem>>, %arg7: memref<1x16x256xf32, #tpu.memory_space<vmem>>) attributes {dimension_semantics = [#tpu.dimension_semantics<parallel>, #tpu.dimension_semantics<parallel>], iteration_bounds = array<i64: 2, 1>, scalar_prefetch = 0 : i64, scratch_operands = 0 : i64, tpu.core_type = #tpu.core_type<tc>, window_params = [{transform_indices = @transform_0, window_bounds = array<i64: 1, 4, 256>}, {pipeline_mode = #tpu.pipeline_mode<synchronous>, transform_indices = @transform_1, window_bounds = array<i64: 32, 4>}, {pipeline_mode = #tpu.pipeline_mode<synchronous>, transform_indices = @transform_2, window_bounds = array<i64: 32, 1>}, {pipeline_mode = #tpu.pipeline_mode<synchronous>, transform_indices = @transform_3, window_bounds = array<i64: 16, 32>}, {pipeline_mode = #tpu.pipeline_mode<synchronous>, transform_indices = @transform_4, window_bounds = array<i64: 16, 1>}, {transform_indices = @transform_5, window_bounds = array<i64: 1, 16, 256>}]} {
    %c0 = arith.constant 0 : index
    %c0_0 = arith.constant 0 : index
    %c0_1 = arith.constant 0 : index
    %0 = vector.load %arg2[%c0, %c0_0, %c0_1] : memref<1x4x256xf32, #tpu.memory_space<vmem>>, vector<1x4x256xf32>
    %1 = vector.shape_cast %0 : vector<1x4x256xf32> to vector<4x256xf32>
    %c0_2 = arith.constant 0 : index
    %c0_3 = arith.constant 0 : index
    %2 = vector.load %arg3[%c0_2, %c0_3] : memref<32x4xf32, #tpu.memory_space<vmem>>, vector<32x4xf32>
    %c0_4 = arith.constant 0 : index
    %c0_5 = arith.constant 0 : index
    %3 = vector.load %arg4[%c0_4, %c0_5] : memref<32x1xf32, #tpu.memory_space<vmem>>, vector<32x1xf32>
    %cst = arith.constant dense<0.000000e+00> : vector<32x256xf32>
    %4 = tpu.matmul %2, %1, %cst {dimension_numbers = #tpu.dot_dimension_numbers<[1], [0], [0], [1], [0, 0, 1, 1], [], []>} : vector<32x4xf32>, vector<4x256xf32>, vector<32x256xf32> -> vector<32x256xf32>
    %5 = vector.broadcast %3 : vector<32x1xf32> to vector<32x256xf32>
    %6 = arith.addf %4, %5 : vector<32x256xf32>
    %cst_6 = arith.constant 0.000000e+00 : f32
    %7 = vector.broadcast %cst_6 : f32 to vector<32x256xf32>
    %8 = arith.maximumf %6, %7 : vector<32x256xf32>
    %c0_7 = arith.constant 0 : index
    %c0_8 = arith.constant 0 : index
    %9 = vector.load %arg5[%c0_7, %c0_8] : memref<16x32xf32, #tpu.memory_space<vmem>>, vector<16x32xf32>
    %c0_9 = arith.constant 0 : index
    %c0_10 = arith.constant 0 : index
    %10 = vector.load %arg6[%c0_9, %c0_10] : memref<16x1xf32, #tpu.memory_space<vmem>>, vector<16x1xf32>
    %cst_11 = arith.constant dense<0.000000e+00> : vector<16x256xf32>
    %11 = tpu.matmul %9, %8, %cst_11 {dimension_numbers = #tpu.dot_dimension_numbers<[1], [0], [0], [1], [0, 0, 1, 1], [], []>} : vector<16x32xf32>, vector<32x256xf32>, vector<16x256xf32> -> vector<16x256xf32>
    %12 = vector.broadcast %10 : vector<16x1xf32> to vector<16x256xf32>
    %13 = arith.addf %11, %12 : vector<16x256xf32>
    %cst_12 = arith.constant 0.000000e+00 : f32
    %14 = vector.broadcast %cst_12 : f32 to vector<16x256xf32>
    %15 = arith.maximumf %13, %14 : vector<16x256xf32>
    %c0_13 = arith.constant 0 : index
    %c0_14 = arith.constant 0 : index
    %c0_15 = arith.constant 0 : index
    %16 = vector.load %arg7[%c0_13, %c0_14, %c0_15] : memref<1x16x256xf32, #tpu.memory_space<vmem>>, vector<1x16x256xf32>
    %17 = vector.shape_cast %16 : vector<1x16x256xf32> to vector<16x256xf32>
    %18 = vector.shape_cast %15 : vector<16x256xf32> to vector<1x16x256xf32>
    tpu.vector_store %arg7[%c0_13, %c0_14, %c0_15], %18 {strides = array<i32>} : memref<1x16x256xf32, #tpu.memory_space<vmem>>, vector<1x16x256xf32>,
    return
  }
  func.func @transform_0(%arg0: i32, %arg1: i32) -> (i32, i32, i32) {
    %c0_i32 = arith.constant 0 : i32
    %c0_i32_0 = arith.constant 0 : i32
    return %arg0, %c0_i32, %arg1 : i32, i32, i32
  }
  func.func @transform_1(%arg0: i32, %arg1: i32) -> (i32, i32) {
    %c0_i32 = arith.constant 0 : i32
    %c0_i32_0 = arith.constant 0 : i32
    %c0_i32_1 = arith.constant 0 : i32
    return %c0_i32, %c0_i32_0 : i32, i32
  }
  func.func @transform_2(%arg0: i32, %arg1: i32) -> (i32, i32) {
    %c0_i32 = arith.constant 0 : i32
    %c0_i32_0 = arith.constant 0 : i32
    %c0_i32_1 = arith.constant 0 : i32
    return %c0_i32, %c0_i32_0 : i32, i32
  }
  func.func @transform_3(%arg0: i32, %arg1: i32) -> (i32, i32) {
    %c0_i32 = arith.constant 0 : i32
    %c0_i32_0 = arith.constant 0 : i32
    %c0_i32_1 = arith.constant 0 : i32
    return %c0_i32, %c0_i32_0 : i32, i32
  }
  func.func @transform_4(%arg0: i32, %arg1: i32) -> (i32, i32) {
    %c0_i32 = arith.constant 0 : i32
    %c0_i32_0 = arith.constant 0 : i32
    %c0_i32_1 = arith.constant 0 : i32
    return %c0_i32, %c0_i32_0 : i32, i32
  }
  func.func @transform_5(%arg0: i32, %arg1: i32) -> (i32, i32, i32) {
    %c0_i32 = arith.constant 0 : i32
    %c0_i32_0 = arith.constant 0 : i32
    return %arg0, %c0_i32, %arg1 : i32, i32, i32
  }
}

</mosaic_0001>

<llo_original>
// kernel: mlp_forward.1
$region0: #{mlp_forward.1}
  #allocation0 [shape = 'u32[]', space=smem, size = 0x4, offset = 0x4, fixed_abs, tag = 'smem constant byte address 0x4 - core index']
  #allocation1 [shape = 'u32[72,128]{1,0:T(1,128)}', space=vmem, size = 0x9000, scoped, tag = 'internal scratch']
  %s0 = inlined_call_operand.vmem [shape: f32[2,4,256], index: 0, kind: input, shape index: {}]
  %s1 = inlined_call_operand.vmem [shape: f32[32,4], index: 1, kind: input, shape index: {}]
  %s2 = inlined_call_operand.vmem [shape: f32[32,1], index: 2, kind: input, shape index: {}]
  %s3 = inlined_call_operand.vmem [shape: f32[16,32], index: 3, kind: input, shape index: {}]
  %s4 = inlined_call_operand.vmem [shape: f32[16,1], index: 4, kind: input, shape index: {}]
  %s5 = inlined_call_operand.vmem [shape: f32[2,16,256], index: 5, kind: output, shape index: {}]
  %s6 = sld [smem:[#allocation0]]
  $region53: #{mlp_forward.1} parent=0
    _
  %s8 = ssub.s32 1, %s6
  %s9 = scalar_select 0, %s8, %s6
  loop: start=0, step=1, limit=4
  $region2: #{mlp_forward.1} parent=0 // loop_pre_header
    _
  $region3: #{mlp_forward.1} parent=0 // loop_header
    %s11 = sphi 0, %s15
    %p12 = scmp.ge.s32.totalorder %s11, 4
    %s18 = sphi 0, %s30
    %s19 = sphi 0, %s26
    %s20 = sphi 0, %s18
    %s21 = sphi 0, %s19
    %s22 = sphi 0, %s20
    %s23 = sphi 0, %s21
    %s35 = sphi 0, %s37
    %s38 = sphi 0, %s35
    %s39 = sphi 0, %s38
    %s55 = sphi 0, %s39
    %s59 = sphi 0, %s59
    %s61 = sphi 0, %s59
    %s62 = sphi 0, %s61
    %s76 = sphi 0, %s62
    %s80 = sphi 0, %s80
    %s82 = sphi 0, %s80
    %s83 = sphi 0, %s82
    %s97 = sphi 0, %s83
    %s101 = sphi 0, %s101
    %s103 = sphi 0, %s101
    %s104 = sphi 0, %s103
    %s118 = sphi 0, %s104
    %s122 = sphi 0, %s122
    %s124 = sphi 0, %s122
    %s125 = sphi 0, %s124
    %s139 = sphi 0, %s125
    %s147 = sphi 0, %s149
    %s150 = sphi 0, %s147
    %s151 = sphi 0, %s150
    %s167 = sphi 0, %s151
  $region4: #{mlp_forward.1} parent=0 // loop_header_branch
    %14 = sbr.rel (%p12) target = $region8
  $region5: #{mlp_forward.1} parent=0 // loop_body
    %s16 = ssub.s32 %s11, 1
    %s17 = ssub.s32 %s11, 2
    %s24 = sadd.s32 1, %s19
    %p25 = scmp.ge.s32.totalorder %s24, 1
    %s26 = scalar_select %p25, 0, %s24
    %s27 = sadd.s32 1, %s18
    %s28 = scalar_select %p25, %s27, %s18
    %p29 = scmp.ge.s32.totalorder %s28, 2
    %s30 = scalar_select %p29, 0, %s28
    %s31 = ssub.s32 %s18, %s30
    %s32 = ssub.s32 %s19, %s26
    %s33 = sor.u32 %s31, %s32
    %p34 = scmp.eq.s32.totalorder %s33, 0
    %s36 = sadd.s32 %s35, 1
    %s37 = scalar_select %p34, %s35, %s36
    %p40 = pneg %p34
    %p41 = scmp.eq.s32.totalorder %s11, 1
    %p42 = por %p40, %p41
    %p43 = scmp.ne.s32.totalorder %s35, %s38
    %p44 = scmp.eq.s32.totalorder %s11, 0
    %p45 = por %p43, %p44
    %p46 = scmp.ne.s32.totalorder %s35, %s38
    %p47 = scmp.eq.s32.totalorder %s16, 1
    %p48 = por %p46, %p47
    %p49 = scmp.ne.s32.totalorder %s38, %s39
    %p50 = scmp.eq.s32.totalorder %s16, 0
    %p51 = por %p49, %p50
    %p52 = scmp.ne.s32.totalorder %s38, %s39
    %p53 = scmp.eq.s32.totalorder %s17, 1
    %p54 = por %p52, %p53
    %p56 = scmp.ne.s32.totalorder %s39, %s55
    %p57 = scmp.eq.s32.totalorder %s17, 0
    %p58 = por %p56, %p57
    %s60 = sadd.s32 %s59, 1
    %p63 = scmp.eq.s32.totalorder %s11, 1
    %p64 = scmp.ne.s32.totalorder %s59, %s61
    %p65 = scmp.eq.s32.totalorder %s11, 0
    %p66 = por %p64, %p65
    %p67 = scmp.ne.s32.totalorder %s59, %s61
    %p68 = scmp.eq.s32.totalorder %s16, 1
    %p69 = por %p67, %p68
    %p70 = scmp.ne.s32.totalorder %s61, %s62
    %p71 = scmp.eq.s32.totalorder %s16, 0
    %p72 = por %p70, %p71
    %p73 = scmp.ne.s32.totalorder %s61, %s62
    %p74 = scmp.eq.s32.totalorder %s17, 1
    %p75 = por %p73, %p74
    %p77 = scmp.ne.s32.totalorder %s62, %s76
    %p78 = scmp.eq.s32.totalorder %s17, 0
    %p79 = por %p77, %p78
    %s81 = sadd.s32 %s80, 1
    %p84 = scmp.eq.s32.totalorder %s11, 1
    %p85 = scmp.ne.s32.totalorder %s80, %s82
    %p86 = scmp.eq.s32.totalorder %s11, 0
    %p87 = por %p85, %p86
    %p88 = scmp.ne.s32.totalorder %s80, %s82
    %p89 = scmp.eq.s32.totalorder %s16, 1
    %p90 = por %p88, %p89
    %p91 = scmp.ne.s32.totalorder %s82, %s83
    %p92 = scmp.eq.s32.totalorder %s16, 0
    %p93 = por %p91, %p92
    %p94 = scmp.ne.s32.totalorder %s82, %s83
    %p95 = scmp.eq.s32.totalorder %s17, 1
    %p96 = por %p94, %p95
    %p98 = scmp.ne.s32.totalorder %s83, %s97
    %p99 = scmp.eq.s32.totalorder %s17, 0
    %p100 = por %p98, %p99
    %s102 = sadd.s32 %s101, 1
    %p105 = scmp.eq.s32.totalorder %s11, 1
    %p106 = scmp.ne.s32.totalorder %s101, %s103
    %p107 = scmp.eq.s32.totalorder %s11, 0
    %p108 = por %p106, %p107
    %p109 = scmp.ne.s32.totalorder %s101, %s103
    %p110 = scmp.eq.s32.totalorder %s16, 1
    %p111 = por %p109, %p110
    %p112 = scmp.ne.s32.totalorder %s103, %s104
    %p113 = scmp.eq.s32.totalorder %s16, 0
    %p114 = por %p112, %p113
    %p115 = scmp.ne.s32.totalorder %s103, %s104
    %p116 = scmp.eq.s32.totalorder %s17, 1
    %p117 = por %p115, %p116
    %p119 = scmp.ne.s32.totalorder %s104, %s118
    %p120 = scmp.eq.s32.totalorder %s17, 0
    %p121 = por %p119, %p120
    %s123 = sadd.s32 %s122, 1
    %p126 = scmp.eq.s32.totalorder %s11, 1
    %p127 = scmp.ne.s32.totalorder %s122, %s124
    %p128 = scmp.eq.s32.totalorder %s11, 0
    %p129 = por %p127, %p128
    %p130 = scmp.ne.s32.totalorder %s122, %s124
    %p131 = scmp.eq.s32.totalorder %s16, 1
    %p132 = por %p130, %p131
    %p133 = scmp.ne.s32.totalorder %s124, %s125
    %p134 = scmp.eq.s32.totalorder %s16, 0
    %p135 = por %p133, %p134
    %p136 = scmp.ne.s32.totalorder %s124, %s125
    %p137 = scmp.eq.s32.totalorder %s17, 1
    %p138 = por %p136, %p137
    %p140 = scmp.ne.s32.totalorder %s125, %s139
    %p141 = scmp.eq.s32.totalorder %s17, 0
    %p142 = por %p140, %p141
    %s143 = ssub.s32 %s18, %s30
    %s144 = ssub.s32 %s19, %s26
    %s145 = sor.u32 %s143, %s144
    %p146 = scmp.eq.s32.totalorder %s145, 0
    %s148 = sadd.s32 %s147, 1
    %s149 = scalar_select %p146, %s147, %s148
    %p152 = pneg %p146
    %p153 = scmp.eq.s32.totalorder %s11, 1
    %p154 = por %p152, %p153
    %p155 = scmp.ne.s32.totalorder %s147, %s150
    %p156 = scmp.eq.s32.totalorder %s11, 0
    %p157 = por %p155, %p156
    %p158 = scmp.ne.s32.totalorder %s147, %s150
    %p159 = scmp.eq.s32.totalorder %s16, 1
    %p160 = por %p158, %p159
    %p161 = scmp.ne.s32.totalorder %s150, %s151
    %p162 = scmp.eq.s32.totalorder %s16, 0
    %p163 = por %p161, %p162
    %p164 = scmp.ne.s32.totalorder %s150, %s151
    %p165 = scmp.eq.s32.totalorder %s17, 1
    %p166 = por %p164, %p165
    %p168 = scmp.ne.s32.totalorder %s151, %s167
    %p169 = scmp.eq.s32.totalorder %s17, 0
    %p170 = por %p168, %p169
    %p171 = scmp.le.s32.totalorder 1, %s11
    %p172 = scmp.lt.s32.totalorder %s11, 3
    %p173 = pnand %p171, %p172
    %p174 = pneg %p173
    // Predicated region
    $region9: #{mlp_forward.1} parent=5 // pred_check
      _
    $region10: #{mlp_forward.1} parent=5 // pred_check_branch
      %176 = sbr.rel (%p173) target = $region12
    $region11: #{mlp_forward.1} parent=5 // pred_region
      %s177 = ssub.s32 %s11, 1
      // Predicated region
      $region13: #{mlp_forward.1} parent=11 // pred_check
        %p178 = pneg %p72
      $region14: #{mlp_forward.1} parent=11 // pred_check_branch
        %180 = sbr.rel (%p178) target = $region16
      $region15: #{mlp_forward.1} parent=11 // pred_region
        _
      $region16: #{mlp_forward.1} parent=11 // pred_fallthru
        _
      // Predicated region
      $region17: #{mlp_forward.1} parent=11 // pred_check
        %p181 = pneg %p93
      $region18: #{mlp_forward.1} parent=11 // pred_check_branch
        %183 = sbr.rel (%p181) target = $region20
      $region19: #{mlp_forward.1} parent=11 // pred_region
        _
      $region20: #{mlp_forward.1} parent=11 // pred_fallthru
        _
      // Predicated region
      $region21: #{mlp_forward.1} parent=11 // pred_check
        %p184 = pneg %p114
      $region22: #{mlp_forward.1} parent=11 // pred_check_branch
        %186 = sbr.rel (%p184) target = $region24
      $region23: #{mlp_forward.1} parent=11 // pred_region
        _
      $region24: #{mlp_forward.1} parent=11 // pred_fallthru
        _
      // Predicated region
      $region25: #{mlp_forward.1} parent=11 // pred_check
        %p187 = pneg %p135
      $region26: #{mlp_forward.1} parent=11 // pred_check_branch
        %189 = sbr.rel (%p187) target = $region28
      $region27: #{mlp_forward.1} parent=11 // pred_region
        _
      $region28: #{mlp_forward.1} parent=11 // pred_fallthru
        _
    $region12: #{mlp_forward.1} parent=5 // pred_fallthru
      _
    %p190 = scmp.lt.s32.totalorder %s11, 2
    // Predicated region
    $region29: #{mlp_forward.1} parent=5 // pred_check
      %p191 = pneg %p190
    $region30: #{mlp_forward.1} parent=5 // pred_check_branch
      %193 = sbr.rel (%p191) target = $region32
    $region31: #{mlp_forward.1} parent=5 // pred_region
      // Predicated region
      $region33: #{mlp_forward.1} parent=31 // pred_check
        %p194 = pneg %p45
      $region34: #{mlp_forward.1} parent=31 // pred_check_branch
        %196 = sbr.rel (%p194) target = $region36
      $region35: #{mlp_forward.1} parent=31 // pred_region
        %s197 = smul.u32 2, %s19
        %p198 = scmp.lt.s32.totalorder %s18, 1
        %s199 = scalar_select %p198, %s18, 1
        %p200 = scmp.lt.s32.totalorder %s197, 1
        %s201 = scalar_select %p200, %s197, 1
        %s202 = smul.addr %s199, 2
        %s203 = sadd.s32 %s201, %s202
        %s204 = smul.addr %s203, 4
        %s205 = scalar_lea.vmem %s0, %s204
        %s206 = smul.u32 2, %s19
      $region36: #{mlp_forward.1} parent=31 // pred_fallthru
        _
    $region32: #{mlp_forward.1} parent=5 // pred_fallthru
      _
    %p207 = scmp.le.s32.totalorder 1, %s11
    %p208 = scmp.lt.s32.totalorder %s11, 3
    %p209 = pnand %p207, %p208
    %p210 = pneg %p209
    // Predicated region
    $region37: #{mlp_forward.1} parent=5 // pred_check
      _
    $region38: #{mlp_forward.1} parent=5 // pred_check_branch
      %212 = sbr.rel (%p209) target = $region40
    $region39: #{mlp_forward.1} parent=5 // pred_region
      %s213 = ssub.s32 %s11, 1
      %s214 = smul.u32 2, %s21
      %p215 = scmp.lt.s32.totalorder %s20, 1
      %s216 = scalar_select %p215, %s20, 1
      %p217 = scmp.lt.s32.totalorder %s214, 1
      %s218 = scalar_select %p217, %s214, 1
      %s219 = smul.addr %s216, 2
      %s220 = sadd.s32 %s218, %s219
      %s221 = smul.addr %s220, 4
      %s222 = scalar_lea.vmem %s0, %s221
      %p223 = pneg %p51
      %p224 = pneg %p48
      %p225 = pneg %p72
      %p226 = pneg %p69
      %p227 = pneg %p93
      %p228 = pneg %p90
      %p229 = pneg %p114
      %p230 = pneg %p111
      %p231 = pneg %p135
      %p232 = pneg %p132
      %p233 = pneg %p163
      %p234 = pneg %p160
      %s235 = smul.u32 2, %s21
      %p236 = scmp.lt.s32.totalorder %s20, 1
      %s237 = scalar_select %p236, %s20, 1
      %p238 = scmp.lt.s32.totalorder %s235, 1
      %s239 = scalar_select %p238, %s235, 1
      %s240 = smul.addr %s237, 4
      %s241 = sadd.s32 %s239, %s240
      %s242 = smul.addr %s241, 8
      %s243 = scalar_lea.vmem %s5, %s242
      %s244 = smul.u32 2, %s21
      %p245 = scmp.lt.s32.totalorder %s20, 1
      %s246 = scalar_select %p245, %s20, 1
      %p247 = scmp.lt.s32.totalorder %s244, 1
      %s248 = scalar_select %p247, %s244, 1
      %s249 = smul.addr %s246, 2
      %s250 = sadd.s32 %s248, %s249
      %s251 = smul.addr %s250, 4
      %s252 = scalar_lea.vmem %s0, %s251
      %s253 = smul.u32 2, %s21
      %s254 = smul.u32 2, %s21
      %p255 = scmp.lt.s32.totalorder %s20, 1
      %s256 = scalar_select %p255, %s20, 1
      %p257 = scmp.lt.s32.totalorder %s254, 1
      %s258 = scalar_select %p257, %s254, 1
      %s259 = smul.addr %s256, 4
      %s260 = sadd.s32 %s258, %s259
      %s261 = smul.addr %s260, 8
      %s262 = scalar_lea.vmem %s5, %s261
      %s263 = smul.u32 2, %s21
      %v264 = vld [vmem:[%s252] sm:$0xff]
      %v265 = vld [vmem:[%s1] sm:$0xff]
      %v266 = vld [vmem:[%s1 + $0x8] sm:$0xff]
      %v267 = vld [vmem:[%s1 + $0x10] sm:$0xff]
      %v268 = vld [vmem:[%s1 + $0x18] sm:$0xff]
      %v269 = vld [vmem:[%s2] sm:$0xff]
      %v270 = vld [vmem:[%s2 + $0x8] sm:$0xff]
      %v271 = vld [vmem:[%s2 + $0x10] sm:$0xff]
      %v272 = vld [vmem:[%s2 + $0x18] sm:$0xff]
      %274 = vset.pattern.permute.xlu0 0
      %275 = vperm.xlu0 %274, %v269
      %v276 = vpop.permute.xlu0 %275
      %279 = vset.pattern.permute.xlu0 0
      %280 = vperm.xlu0 %279, %v270
      %v281 = vpop.permute.xlu0 %280
      %284 = vset.pattern.permute.xlu0 0
      %285 = vperm.xlu0 %284, %v271
      %v286 = vpop.permute.xlu0 %285
      %289 = vset.pattern.permute.xlu0 0
      %290 = vperm.xlu0 %289, %v272
      %v291 = vpop.permute.xlu0 %290
      %294 = vst [vmem:[#allocation1] ss:$2 sm:$0xff] %v264
      %v295 = vld.sshfl [vmem:[#allocation1] sm:$0xff pattern:$0x75316420]
      %v296 = vld.sshfl [vmem:[#allocation1 + $0x8] sm:$0xff pattern:$0x75316420]
      %vm297 = vcmask 31744
      %v299 = vsel %vm297, %v265, 0
      %v302 = vsel %vm297, %v266, 0
      %v305 = vsel %vm297, %v267, 0
      %v308 = vsel %vm297, %v268, 0
      %vm310 = vcmask 1043456
      %v311 = vsel %vm310, %v295, 0
      %v313 = vsel %vm310, %v296, 0
      %315 = vmatpush.msra.mxu0 0.0
      %316 = vmatpush.msra.mxu0 0.0
      %317 = vmatpush.msra.mxu0 0.0
      %318 = vmatpush.msra.mxu0 0.0
      %319 = vmatpush.msra.mxu0 0.0
      %320 = vmatpush.msra.mxu0 0.0
      %321 = vmatpush.msra.mxu0 0.0
      %322 = vmatpush.msra.mxu0 0.0
      %323 = vmatpush.msra.mxu0 0.0
      %324 = vmatpush.msra.mxu0 0.0
      %325 = vmatpush.msra.mxu0 0.0
      %326 = vmatpush.msra.mxu0 0.0
      %327 = vmatpush.msra.mxu0 0.0
      %328 = vmatpush.msra.mxu0 0.0
      %329 = vmatpush.msra.mxu0 0.0
      %330 = vmatpush.msra.mxu0 %v311
      %331 = vmatmul.f32.gmra.mxu0 %v299
      %v332 = vpop.f32.mrf.mxu0
      %v333 = vadd.f32 %v276, %v332
      %334 = vmatmul.f32.gmra.mxu0 %v302
      %v335 = vpop.f32.mrf.mxu0
      %v336 = vadd.f32 %v281, %v335
      %337 = vmatmul.f32.gmra.mxu0 %v305
      %v338 = vpop.f32.mrf.mxu0
      %v339 = vadd.f32 %v286, %v338
      %340 = vmatmul.f32.gmra.mxu0 %v308
      %v341 = vpop.f32.mrf.mxu0
      %v342 = vadd.f32 %v291, %v341
      %343 = vdwg.mxu0
      %344 = vmatpush.msra.mxu0 0.0
      %345 = vmatpush.msra.mxu0 0.0
      %346 = vmatpush.msra.mxu0 0.0
      %347 = vmatpush.msra.mxu0 0.0
      %348 = vmatpush.msra.mxu0 0.0
      %349 = vmatpush.msra.mxu0 0.0
      %350 = vmatpush.msra.mxu0 0.0
      %351 = vmatpush.msra.mxu0 0.0
      %352 = vmatpush.msra.mxu0 0.0
      %353 = vmatpush.msra.mxu0 0.0
      %354 = vmatpush.msra.mxu0 0.0
      %355 = vmatpush.msra.mxu0 0.0
      %356 = vmatpush.msra.mxu0 0.0
      %357 = vmatpush.msra.mxu0 0.0
      %358 = vmatpush.msra.mxu0 0.0
      %359 = vmatpush.msra.mxu0 %v313
      %360 = vmatmul.f32.gmra.mxu0 %v299
      %v361 = vpop.f32.mrf.mxu0
      %v362 = vadd.f32 %v276, %v361
      %363 = vmatmul.f32.gmra.mxu0 %v302
      %v364 = vpop.f32.mrf.mxu0
      %v365 = vadd.f32 %v281, %v364
      %366 = vmatmul.f32.gmra.mxu0 %v305
      %v367 = vpop.f32.mrf.mxu0
      %v368 = vadd.f32 %v286, %v367
      %369 = vmatmul.f32.gmra.mxu0 %v308
      %v370 = vpop.f32.mrf.mxu0
      %v371 = vadd.f32 %v291, %v370
      %372 = vdwg.mxu0
      %v373 = vmax.f32 %v333, 0.0
      %v374 = vmax.f32 %v362, 0.0
      %v375 = vmax.f32 %v336, 0.0
      %v376 = vmax.f32 %v365, 0.0
      %v377 = vmax.f32 %v339, 0.0
      %v378 = vmax.f32 %v368, 0.0
      %v379 = vmax.f32 %v342, 0.0
      %v380 = vmax.f32 %v371, 0.0
      %v381 = vld [vmem:[%s3] sm:$0xff]
      %v382 = vld [vmem:[%s3 + $0x8] sm:$0xff]
      %v383 = vld [vmem:[%s4] sm:$0xff]
      %v384 = vld [vmem:[%s4 + $0x8] sm:$0xff]
      %386 = vset.pattern.permute.xlu0 0
      %387 = vperm.xlu0 %386, %v383
      %v388 = vpop.permute.xlu0 %387
      %391 = vset.pattern.permute.xlu0 0
      %392 = vperm.xlu0 %391, %v384
      %v393 = vpop.permute.xlu0 %392
      %vm395 = vcmask 261120
      %v397 = vsel %vm395, %v381, 0
      %v400 = vsel %vm395, %v382, 0
      %402 = vmatpush.msra.mxu0 0.0
      %403 = vmatpush.msra.mxu0 0.0
      %404 = vmatpush.msra.mxu0 0.0
      %405 = vmatpush.msra.mxu0 0.0
      %406 = vmatpush.msra.mxu0 0.0
      %407 = vmatpush.msra.mxu0 0.0
      %408 = vmatpush.msra.mxu0 0.0
      %409 = vmatpush.msra.mxu0 0.0
      %410 = vmatpush.msra.mxu0 0.0
      %411 = vmatpush.msra.mxu0 0.0
      %412 = vmatpush.msra.mxu0 0.0
      %413 = vmatpush.msra.mxu0 0.0
      %414 = vmatpush.msra.mxu0 %v379
      %415 = vmatpush.msra.mxu0 %v377
      %416 = vmatpush.msra.mxu0 %v375
      %417 = vmatpush.msra.mxu0 %v373
      %418 = vmatmul.f32.gmra.mxu0 %v397
      %v419 = vpop.f32.mrf.mxu0
      %v420 = vadd.f32 %v388, %v419
      %421 = vmatmul.f32.gmra.mxu0 %v400
      %v422 = vpop.f32.mrf.mxu0
      %v423 = vadd.f32 %v393, %v422
      %424 = vdwg.mxu0
      %425 = vmatpush.msra.mxu0 0.0
      %426 = vmatpush.msra.mxu0 0.0
      %427 = vmatpush.msra.mxu0 0.0
      %428 = vmatpush.msra.mxu0 0.0
      %429 = vmatpush.msra.mxu0 0.0
      %430 = vmatpush.msra.mxu0 0.0
      %431 = vmatpush.msra.mxu0 0.0
      %432 = vmatpush.msra.mxu0 0.0
      %433 = vmatpush.msra.mxu0 0.0
      %434 = vmatpush.msra.mxu0 0.0
      %435 = vmatpush.msra.mxu0 0.0
      %436 = vmatpush.msra.mxu0 0.0
      %437 = vmatpush.msra.mxu0 %v380
      %438 = vmatpush.msra.mxu0 %v378
      %439 = vmatpush.msra.mxu0 %v376
      %440 = vmatpush.msra.mxu0 %v374
      %441 = vmatmul.f32.gmra.mxu0 %v397
      %v442 = vpop.f32.mrf.mxu0
      %v443 = vadd.f32 %v388, %v442
      %444 = vmatmul.f32.gmra.mxu0 %v400
      %v445 = vpop.f32.mrf.mxu0
      %v446 = vadd.f32 %v393, %v445
      %447 = vdwg.mxu0
      %v448 = vmax.f32 %v420, 0.0
      %v449 = vmax.f32 %v443, 0.0
      %v450 = vmax.f32 %v423, 0.0
      %v451 = vmax.f32 %v446, 0.0
      %452 = vst [vmem:[%s262] sm:$0xff] %v448
      %453 = vst [vmem:[%s262 + $0x8] sm:$0xff] %v449
      %454 = vst [vmem:[%s262 + $0x10] sm:$0xff] %v450
      %455 = vst [vmem:[%s262 + $0x18] sm:$0xff] %v451
      %s456 = smul.u32 2, %s21
      %p457 = scmp.lt.s32.totalorder %s20, 1
      %s458 = scalar_select %p457, %s20, 1
      %p459 = scmp.lt.s32.totalorder %s456, 1
      %s460 = scalar_select %p459, %s456, 1
      %s461 = smul.addr %s458, 4
      %s462 = sadd.s32 %s460, %s461
      %s463 = smul.addr %s462, 8
      %s464 = scalar_lea.vmem %s5, %s463
      // Predicated region
      $region41: #{mlp_forward.1} parent=39 // pred_check
        %p465 = pneg %p160
      $region42: #{mlp_forward.1} parent=39 // pred_check_branch
        %467 = sbr.rel (%p465) target = $region44
      $region43: #{mlp_forward.1} parent=39 // pred_region
        %s468 = smul.u32 2, %s21
      $region44: #{mlp_forward.1} parent=39 // pred_fallthru
        _
    $region40: #{mlp_forward.1} parent=5 // pred_fallthru
      _
    %p469 = scmp.le.s32.totalorder 2, %s11
    // Predicated region
    $region45: #{mlp_forward.1} parent=5 // pred_check
      %p470 = pneg %p469
    $region46: #{mlp_forward.1} parent=5 // pred_check_branch
      %472 = sbr.rel (%p470) target = $region48
    $region47: #{mlp_forward.1} parent=5 // pred_region
      %s473 = ssub.s32 %s11, 2
      // Predicated region
      $region49: #{mlp_forward.1} parent=47 // pred_check
        %p474 = pneg %p166
      $region50: #{mlp_forward.1} parent=47 // pred_check_branch
        %476 = sbr.rel (%p474) target = $region52
      $region51: #{mlp_forward.1} parent=47 // pred_region
        %s477 = smul.u32 2, %s23
        %p478 = scmp.lt.s32.totalorder %s22, 1
        %s479 = scalar_select %p478, %s22, 1
        %p480 = scmp.lt.s32.totalorder %s477, 1
        %s481 = scalar_select %p480, %s477, 1
        %s482 = smul.addr %s479, 4
        %s483 = sadd.s32 %s481, %s482
        %s484 = smul.addr %s483, 8
        %s485 = scalar_lea.vmem %s5, %s484
      $region52: #{mlp_forward.1} parent=47 // pred_fallthru
        _
    $region48: #{mlp_forward.1} parent=5 // pred_fallthru
      _
  $region6: #{mlp_forward.1} parent=0 // loop_footer
    %s15 = sadd.s32 1, %s11
  $region7: #{mlp_forward.1} parent=0 // loop_footer_branch
    %10 = sbr.rel target = $region3
  $region8: #{mlp_forward.1} parent=0 // loop_exit
    _

</llo_original>
